<compile_context>
chip_gen: v7x
topology: tpu7x:2x2x1
jax: 0.10.0
libtpu: 0.0.40
codegen_flags: <defaults>
</compile_context>

<pallas_src>
import jax
import jax.numpy as jnp
from jax.experimental import pallas as pl
from jax.experimental.pallas import tpu as pltpu

LANES = 128
SUBLANES = 8
MAX_TILE_ROWS = 4096            # (4096, 128) f32 block = 2 MiB per input buffer


def _round_up(v, m):
    return ((v + m - 1) // m) * m


def _round_down(v, m):
    return (v // m) * m


def abstract_layer_forward(x):
    # TODO(synk): AbstractLayer.forward is a stub in the source module; identity
    # is used as the deterministic concrete forward (self.vars = [], no params).
    return x


def _make_geth_kernel(tile_rows, steps, total_tiles, valid_last_rows, needs_mask):
    def reduce_block(vals, out_ref):
        # (tile_rows, 128) -> (8, 128) with pure VPU adds (no cross-lane XLU);
        # accumulate into the resident (1, 8, 128) output block.
        partial = vals.reshape(tile_rows // SUBLANES, SUBLANES, LANES).sum(axis=0)
        out_ref[...] += partial[None]

    def kernel(p_ref, fx_ref, out_ref):
        i = pl.program_id(1)                       # "arbitrary" reduction axis

        @pl.when(i == 0)
        def _():
            out_ref[...] = jnp.zeros_like(out_ref)

        prod = p_ref[...].astype(jnp.float32) * fx_ref[...].astype(jnp.float32)

        if not needs_mask:
            reduce_block(prod, out_ref)
        else:
            s = pl.program_id(0)                   # "parallel" split axis
            is_last = (s * steps + i) == (total_tiles - 1)

            @pl.when(jnp.logical_not(is_last))
            def _():
                reduce_block(prod, out_ref)

            @pl.when(is_last)
            def _():
                # Only the globally-last tile is ragged; zero rows past the end
                # (out-of-bounds rows of the boundary block hold undefined data).
                row_ids = jax.lax.broadcasted_iota(
                    jnp.int32, (tile_rows, LANES), 0)
                reduce_block(
                    jnp.where(row_ids < valid_last_rows, prod, 0.0), out_ref)

    return kernel


def abstract_layer_getH(x, p):
    """H = sum(p * forward(x)) computed in a Pallas reduction kernel."""
    fx = abstract_layer_forward(x)

    p_flat = p.reshape(-1)
    fx_flat = fx.reshape(-1)
    n = int(p_flat.shape[0])

    # Tiny inputs: a kernel launch is not worth it; XLA handles it exactly.
    if n < SUBLANES * LANES:
        return jnp.sum(p_flat.astype(jnp.float32) * fx_flat.astype(jnp.float32))

    # Lane-aligned prefix goes through the kernel; the <128-element tail (if
    # any) is summed by XLA.  No jnp.pad full-array copy for aligned sizes.
    n_lane = _round_down(n, LANES)
    tail = None
    if n_lane != n:
        tail = jnp.sum(p_flat[n_lane:].astype(jnp.float32)
                       * fx_flat[n_lane:].astype(jnp.float32))
        # TODO(synk): the aligned-prefix slice below may still materialize one
        # copy for lane-unaligned sizes; true zero-copy there would need 1-D
        # block handling inside the kernel.
        p_flat = p_flat[:n_lane]
        fx_flat = fx_flat[:n_lane]

    rows = n_lane // LANES                      # >= SUBLANES here
    p2 = p_flat.reshape(rows, LANES)            # bitcast reshape (no copy)
    fx2 = fx_flat.reshape(rows, LANES)

    # Tile rows: multiple of 8, never larger than the array (ragged last tile
    # is handled by the in-kernel mask).
    tile_rows = min(MAX_TILE_ROWS, _round_down(rows, SUBLANES))
    total_tiles = pl.cdiv(rows, tile_rows)

    # Prefer an even tile count so the 2-way core split divides cleanly
    # (no clamped duplicate-tile DMAs); fall back to a single split otherwise.
    if total_tiles >= 2 and total_tiles % 2 != 0:
        cand_rows = _round_up(pl.cdiv(rows, total_tiles + 1), SUBLANES)
        cand_tiles = pl.cdiv(rows, cand_rows)
        if cand_tiles % 2 == 0 and cand_rows <= rows:
            tile_rows, total_tiles = cand_rows, cand_tiles

    num_splits = 2 if (total_tiles >= 2 and total_tiles % 2 == 0) else 1
    steps = total_tiles // num_splits
    needs_mask = (total_tiles * tile_rows) != rows
    valid_last_rows = rows - (total_tiles - 1) * tile_rows

    kernel = _make_geth_kernel(tile_rows, steps, total_tiles,
                               valid_last_rows, needs_mask)

    def in_map(s, i, _steps=steps):
        return (s * _steps + i, 0)

    cost = pl.CostEstimate(
        flops=2 * n_lane,
        transcendentals=0,
        bytes_accessed=n_lane * (p2.dtype.itemsize + fx2.dtype.itemsize)
        + num_splits * SUBLANES * LANES * 4,
    )

    partials = pl.pallas_call(
        kernel,
        out_shape=jax.ShapeDtypeStruct((num_splits, SUBLANES, LANES), jnp.float32),
        grid=(num_splits, steps),
        in_specs=[
            pl.BlockSpec((tile_rows, LANES), in_map),
            pl.BlockSpec((tile_rows, LANES), in_map),
        ],
        out_specs=pl.BlockSpec((1, SUBLANES, LANES), lambda s, i: (s, 0, 0)),
        compiler_params=pltpu.CompilerParams(
            # "parallel" on the leading split shards across TensorCores where
            # the chip has more than one (v7x); harmless (sequential) elsewhere.
            dimension_semantics=("parallel", "arbitrary"),
        ),
        cost_estimate=cost,
    )(p2, fx2)

    # Tiny final cross-lane reduction (<= 2 * 8 * 128 f32) done by XLA.
    H = jnp.sum(partials)
    if tail is not None:
        H = H + tail
    return H


def abstract_layer_backward(x, p):
    """p_next = d/dx sum(p * forward(x)); for the identity forward this is p."""
    return p


if __name__ == "__main__":
    key = jax.random.PRNGKey(0)
    kx, kp = jax.random.split(key)

    getH = jax.jit(abstract_layer_getH)

    # Small NCHW demo shape consistent with a conv-style layer input.
    x = jax.random.normal(kx, (2, 4, 16, 16), dtype=jnp.float32)
    p = jax.random.normal(kp, (2, 4, 16, 16), dtype=jnp.float32)

    H = jax.block_until_ready(getH(x, p))
    H_ref = jnp.sum(p * x)
    assert jnp.allclose(H, H_ref, rtol=1e-5, atol=1e-3), (H, H_ref)

    p_next = jax.block_until_ready(abstract_layer_backward(x, p))
    assert p_next.shape == p.shape
    assert jnp.array_equal(p_next, p)

    # Multi-tile + 2-way split + ragged-last-tile path:
    # 8*9*125*128 = 1,152,000 elems -> rows=9000 -> 4 tiles of 2256 rows,
    # grid (2, 2), last tile masked to 2232 valid rows.
    x2 = jax.random.normal(kx, (8, 9, 125, 128), dtype=jnp.float32)
    p2 = jax.random.normal(kp, (8, 9, 125, 128), dtype=jnp.float32)
    H2 = jax.block_until_ready(getH(x2, p2))
    H2_ref = jnp.sum(p2 * x2)
    assert jnp.allclose(H2, H2_ref, rtol=1e-3, atol=1.0), (H2, H2_ref)

    # Lane-unaligned size: 3*5*100*13 = 19,500 elems -> 19,456-element aligned
    # prefix through the kernel, 44-element tail summed by XLA.
    x3 = jax.random.normal(kx, (3, 5, 100, 13), dtype=jnp.float32)
    p3 = jax.random.normal(kp, (3, 5, 100, 13), dtype=jnp.float32)
    H3 = jax.block_until_ready(getH(x3, p3))
    H3_ref = jnp.sum(p3 * x3)
    assert jnp.allclose(H3, H3_ref, rtol=1e-3, atol=5e-2), (H3, H3_ref)

    print("KERNEL_OK")
</pallas_src>

<mosaic_0001>
module attributes {stable_mosaic.version = 11 : i64} {
  func.func @kernel(%arg0: i32, %arg1: i32, %arg2: memref<16x128xf32, #tpu.memory_space<vmem>>, %arg3: memref<16x128xf32, #tpu.memory_space<vmem>>, %arg4: memref<1x8x128xf32, #tpu.memory_space<vmem>>) attributes {dimension_semantics = [#tpu.dimension_semantics<parallel>, #tpu.dimension_semantics<arbitrary>], iteration_bounds = array<i64: 1, 1>, scalar_prefetch = 0 : i64, scratch_operands = 0 : i64, tpu.core_type = #tpu.core_type<tc>, window_params = [{transform_indices = @transform_0, window_bounds = array<i64: 16, 128>}, {transform_indices = @transform_1, window_bounds = array<i64: 16, 128>}, {transform_indices = @transform_2, window_bounds = array<i64: 1, 8, 128>}]} {
    %c0_i32 = arith.constant 0 : i32
    %0 = arith.cmpi eq, %arg1, %c0_i32 : i32
    %1 = arith.extui %0 : i1 to i32
    %c0_i32_0 = arith.constant 0 : i32
    %2 = arith.cmpi ne, %1, %c0_i32_0 : i32
    scf.if %2 {
      %cst_10 = arith.constant 0.000000e+00 : f32
      %12 = vector.broadcast %cst_10 : f32 to vector<1x8x128xf32>
      %c0_11 = arith.constant 0 : index
      %c0_12 = arith.constant 0 : index
      %c0_13 = arith.constant 0 : index
      %13 = vector.load %arg4[%c0_11, %c0_12, %c0_13] : memref<1x8x128xf32, #tpu.memory_space<vmem>>, vector<1x8x128xf32>
      tpu.vector_store %arg4[%c0_11, %c0_12, %c0_13], %12 {strides = array<i32>} : memref<1x8x128xf32, #tpu.memory_space<vmem>>, vector<1x8x128xf32>,
    } else {
    }
    %c0 = arith.constant 0 : index
    %c0_1 = arith.constant 0 : index
    %3 = vector.load %arg2[%c0, %c0_1] : memref<16x128xf32, #tpu.memory_space<vmem>>, vector<16x128xf32>
    %c0_2 = arith.constant 0 : index
    %c0_3 = arith.constant 0 : index
    %4 = vector.load %arg3[%c0_2, %c0_3] : memref<16x128xf32, #tpu.memory_space<vmem>>, vector<16x128xf32>
    %5 = arith.mulf %3, %4 : vector<16x128xf32>
    %6 = vector.shape_cast %5 : vector<16x128xf32> to vector<2x8x128xf32>
    %cst = arith.constant dense<0.000000e+00> : vector<8x128xf32>
    %7 = vector.multi_reduction <add>, %6, %cst [0] : vector<2x8x128xf32> to vector<8x128xf32>
    %c0_4 = arith.constant 0 : index
    %c0_5 = arith.constant 0 : index
    %c0_6 = arith.constant 0 : index
    %8 = vector.load %arg4[%c0_4, %c0_5, %c0_6] : memref<1x8x128xf32, #tpu.memory_space<vmem>>, vector<1x8x128xf32>
    %9 = vector.shape_cast %7 : vector<8x128xf32> to vector<1x8x128xf32>
    %10 = arith.addf %8, %9 : vector<1x8x128xf32>
    %c0_7 = arith.constant 0 : index
    %c0_8 = arith.constant 0 : index
    %c0_9 = arith.constant 0 : index
    %11 = vector.load %arg4[%c0_7, %c0_8, %c0_9] : memref<1x8x128xf32, #tpu.memory_space<vmem>>, vector<1x8x128xf32>
    tpu.vector_store %arg4[%c0_7, %c0_8, %c0_9], %10 {strides = array<i32>} : memref<1x8x128xf32, #tpu.memory_space<vmem>>, vector<1x8x128xf32>,
    return
  }
  func.func @transform_0(%arg0: i32, %arg1: i32) -> (i32, i32) {
    %c1_i32 = arith.constant 1 : i32
    %0 = arith.muli %arg0, %c1_i32 : i32
    %1 = arith.addi %0, %arg1 : i32
    %c0_i32 = arith.constant 0 : i32
    %c0_i32_0 = arith.constant 0 : i32
    return %1, %c0_i32 : i32, i32
  }
  func.func @transform_1(%arg0: i32, %arg1: i32) -> (i32, i32) {
    %c1_i32 = arith.constant 1 : i32
    %0 = arith.muli %arg0, %c1_i32 : i32
    %1 = arith.addi %0, %arg1 : i32
    %c0_i32 = arith.constant 0 : i32
    %c0_i32_0 = arith.constant 0 : i32
    return %1, %c0_i32 : i32, i32
  }
  func.func @transform_2(%arg0: i32, %arg1: i32) -> (i32, i32, i32) {
    %c0_i32 = arith.constant 0 : i32
    %c0_i32_0 = arith.constant 0 : i32
    %c0_i32_1 = arith.constant 0 : i32
    return %arg0, %c0_i32, %c0_i32_0 : i32, i32, i32
  }
}

</mosaic_0001>

<llo_original>
// kernel: abstract_layer_getH.1
$region0: #{abstract_layer_getH.1}
  #allocation0 [shape = 'u32[]', space=smem, size = 0x4, offset = 0x4, fixed_abs, tag = 'smem constant byte address 0x4 - core index']
  #allocation1 [shape = 'u32[144,128]{1,0:T(1,128)}', space=vmem, size = 0x12000, scoped, tag = 'internal scratch']
  %s0 = inlined_call_operand.vmem [shape: f32[16,128], index: 0, kind: input, shape index: {}]
  %s1 = inlined_call_operand.vmem [shape: f32[16,128], index: 1, kind: input, shape index: {}]
  %s2 = inlined_call_operand.vmem [shape: f32[1,8,128], index: 2, kind: output, shape index: {}]
  %s3 = sld [smem:[#allocation0]]
  $region22: #{abstract_layer_getH.1} parent=0
    _
  %s5 = ssub.s32 1, %s3
  %s6 = scalar_select 0, %s5, %s3
  // Predicated region
  $region2: #{abstract_layer_getH.1} parent=0 // pred_check
    _
  $region3: #{abstract_layer_getH.1} parent=0 // pred_check_branch
    %8 = sbr.rel (0) target = $region5
  $region4: #{abstract_layer_getH.1} parent=0 // pred_region
    %s9 = sadd.s32 0, 0
    %s10 = smul.u32 2, %s9
    %p11 = scmp.lt.s32.totalorder %s10, 1
    %s12 = scalar_select %p11, %s10, 1
    %s13 = smul.addr %s12, 8
    %s14 = scalar_lea.vmem %s0, %s13
    %s15 = sadd.s32 0, 0
    %s16 = smul.u32 2, %s15
  $region5: #{abstract_layer_getH.1} parent=0 // pred_fallthru
    _
  // Predicated region
  $region6: #{abstract_layer_getH.1} parent=0 // pred_check
    _
  $region7: #{abstract_layer_getH.1} parent=0 // pred_check_branch
    %18 = sbr.rel (0) target = $region9
  $region8: #{abstract_layer_getH.1} parent=0 // pred_region
    %s19 = sadd.s32 0, 0
    %s20 = smul.u32 2, %s19
    %p21 = scmp.lt.s32.totalorder %s20, 1
    %s22 = scalar_select %p21, %s20, 1
    %s23 = smul.addr %s22, 8
    %s24 = scalar_lea.vmem %s1, %s23
    %s25 = sadd.s32 0, 0
    %s26 = smul.u32 2, %s25
  $region9: #{abstract_layer_getH.1} parent=0 // pred_fallthru
    _
  %s27 = sadd.s32 0, 0
  %s28 = smul.u32 2, %s27
  %p29 = scmp.lt.s32.totalorder %s28, 1
  %s30 = scalar_select %p29, %s28, 1
  %s31 = smul.addr %s30, 8
  %s32 = scalar_lea.vmem %s0, %s31
  %s33 = sadd.s32 0, 0
  %s34 = smul.u32 2, %s33
  %p35 = scmp.lt.s32.totalorder %s34, 1
  %s36 = scalar_select %p35, %s34, 1
  %s37 = smul.addr %s36, 8
  %s38 = scalar_lea.vmem %s1, %s37
  %s39 = sadd.s32 0, 0
  %s40 = smul.u32 2, %s39
  %p41 = scmp.lt.s32.totalorder %s40, 1
  %s42 = scalar_select %p41, %s40, 1
  %s43 = smul.addr %s42, 8
  %s44 = scalar_lea.vmem %s0, %s43
  %s45 = sadd.s32 0, 0
  %s46 = smul.u32 2, %s45
  %s47 = sadd.s32 0, 0
  %s48 = smul.u32 2, %s47
  %p49 = scmp.lt.s32.totalorder %s48, 1
  %s50 = scalar_select %p49, %s48, 1
  %s51 = smul.addr %s50, 8
  %s52 = scalar_lea.vmem %s1, %s51
  %s53 = sadd.s32 0, 0
  %s54 = smul.u32 2, %s53
  %p55 = scmp.eq.s32.totalorder 0, 0
  // Predicated region
  $region10: #{abstract_layer_getH.1} parent=0 // pred_check
    %p56 = pneg %p55
  $region11: #{abstract_layer_getH.1} parent=0 // pred_check_branch
    %58 = sbr.rel (%p56) target = $region13
  $region12: #{abstract_layer_getH.1} parent=0 // pred_region
    %59 = vst [vmem:[%s2] sm:$0xff] 0.0
  $region13: #{abstract_layer_getH.1} parent=0 // pred_fallthru
    _
  %v60 = vld [vmem:[%s44] sm:$0xff]
  %v61 = vld [vmem:[%s44 + $0x8] sm:$0xff]
  %v62 = vld [vmem:[%s52] sm:$0xff]
  %v63 = vld [vmem:[%s52 + $0x8] sm:$0xff]
  %v64 = vmul.f32 %v60, %v62
  %v65 = vmul.f32 %v61, %v63
  %v66 = vadd.f32 %v64, %v65
  %v67 = vld [vmem:[%s2] sm:$0xff]
  %v68 = vadd.f32 %v67, %v66
  %69 = vst [vmem:[%s2] sm:$0xff] %v68
  // Predicated region
  $region14: #{abstract_layer_getH.1} parent=0 // pred_check
    _
  $region15: #{abstract_layer_getH.1} parent=0 // pred_check_branch
    %71 = sbr.rel (0) target = $region17
  $region16: #{abstract_layer_getH.1} parent=0 // pred_region
    _
  $region17: #{abstract_layer_getH.1} parent=0 // pred_fallthru
    _
  // Predicated region
  $region18: #{abstract_layer_getH.1} parent=0 // pred_check
    _
  $region19: #{abstract_layer_getH.1} parent=0 // pred_check_branch
    %73 = sbr.rel (0) target = $region21
  $region20: #{abstract_layer_getH.1} parent=0 // pred_region
    _
  $region21: #{abstract_layer_getH.1} parent=0 // pred_fallthru
    _

</llo_original>
